<compile_context>
chip_gen: v6e
topology: v6e:2x2x1
jax: 0.10.0
libtpu: 0.0.40
codegen_flags: <defaults>
</compile_context>

<pallas_src>
import functools
import math

import jax
import jax.numpy as jnp
import numpy as np
from jax.experimental import pallas as pl
from jax.experimental.pallas import tpu as pltpu


# ---------------------------------------------------------------------------
# DCT basis (same construction as DCTLayer._build_dct_matrix)
# ---------------------------------------------------------------------------
def build_dct_matrix(n=8):
    mat = np.zeros((n, n), np.float32)
    for i in range(n):
        for j in range(n):
            scale = math.sqrt(1.0 / n) if i == 0 else math.sqrt(2.0 / n)
            mat[i, j] = scale * math.cos(math.pi * (2 * j + 1) * i / (2 * n))
    return mat


# ---------------------------------------------------------------------------
# Tiling policy
# ---------------------------------------------------------------------------
def _mxu_tile_cap():
    """Kron-factor cap: 128 on v5e (weak f32 MXU, 16 MiB scoped VMEM), else 256."""
    try:
        kind = jax.devices()[0].device_kind.lower()
    except Exception:
        return 256
    if "v5 lite" in kind or "v5lite" in kind or "v5e" in kind:
        return 128
    return 256


def _choose_tiles(hp, wp, block_size):
    cap = _mxu_tile_cap()
    cap = max(block_size, (cap // block_size) * block_size)
    th = hp if hp <= cap else cap                 # hp is a multiple of block_size
    if wp <= cap:
        tw = wblk = wp                            # single full-width strip
    else:
        tw = cap
        # a few strips per DMA block (~1024 lanes target), never wider than wp
        n_strips = max(1, min(1024 // tw, wp // tw))
        wblk = tw * n_strips
    return th, tw, wblk


# ---------------------------------------------------------------------------
# Pallas kernel: one (plane, H-tile, W-block) -> strip-wise fused MXU matmuls
# ---------------------------------------------------------------------------
def _make_dct_kernel(th, tw, wblk, hp, wp):
    n_strips = wblk // tw
    row_partial = (hp % th) != 0      # last H tile is ragged (cdiv grid)
    col_partial = (wp % wblk) != 0    # last W block is ragged (cdiv grid)

    def kernel(x_ref, lrow_ref, rcol_ref, o_ref):
        lrow = lrow_ref[...]          # (th, th)  I (x) D   (or D^T)
        rcol = rcol_ref[...]          # (tw, tw)  I (x) D^T (or D)
        if row_partial:
            r_iota = jax.lax.broadcasted_iota(jnp.int32, (th, tw), 0)
            row_ok = r_iota < (hp - pl.program_id(1) * th)
        if col_partial:
            c_iota = jax.lax.broadcasted_iota(jnp.int32, (th, tw), 1)
            col_rem = wp - pl.program_id(2) * wblk
        for s in range(n_strips):
            xs = x_ref[0, :, s * tw:(s + 1) * tw]
            if row_partial or col_partial:
                # Zero the pad region of ragged edge tiles: garbage there would
                # otherwise reach valid outputs through the matmul (0 * NaN).
                ok = None
                if row_partial:
                    ok = row_ok
                if col_partial:
                    cok = c_iota < (col_rem - s * tw)
                    ok = cok if ok is None else ok & cok
                xs = jnp.where(ok, xs, 0)
            xs = xs.astype(jnp.float32)
            ys = jnp.dot(lrow, xs, preferred_element_type=jnp.float32)
            zs = jnp.dot(ys, rcol, preferred_element_type=jnp.float32)
            o_ref[0, :, s * tw:(s + 1) * tw] = zs.astype(o_ref.dtype)

    return kernel


# ---------------------------------------------------------------------------
# Wrapper matching DCTLayer.forward semantics
# ---------------------------------------------------------------------------
def dct_layer(x, dct_mat, *, block_size=8, inverse=False):
    B, C, H, W = x.shape
    pad_h = (-H) % block_size
    pad_w = (-W) % block_size
    if pad_h or pad_w:
        x = jnp.pad(x, ((0, 0), (0, 0), (0, pad_h), (0, pad_w)))
    Hp, Wp = H + pad_h, W + pad_w

    xf = x.reshape(B * C, Hp, Wp)                 # free reshape, keeps orig dtype

    th, tw, wblk = _choose_tiles(Hp, Wp, block_size)

    # Small host-side Kron factors (<=256x256), baked as constants per shape.
    d = np.asarray(dct_mat, dtype=np.float32)
    dl, dr = (d, d.T) if not inverse else (d.T, d)
    lrow = jnp.asarray(np.kron(np.eye(th // block_size, dtype=np.float32), dl))
    rcol = jnp.asarray(np.kron(np.eye(tw // block_size, dtype=np.float32), dr))

    grid = (B * C, pl.cdiv(Hp, th), pl.cdiv(Wp, wblk))

    elems = B * C * Hp * Wp
    cost = pl.CostEstimate(
        flops=2 * (th + tw) * elems,
        transcendentals=0,
        bytes_accessed=2 * elems * x.dtype.itemsize + 4 * (lrow.size + rcol.size),
    )

    out = pl.pallas_call(
        _make_dct_kernel(th, tw, wblk, Hp, Wp),
        out_shape=jax.ShapeDtypeStruct((B * C, Hp, Wp), x.dtype),
        grid_spec=pltpu.PrefetchScalarGridSpec(
            num_scalar_prefetch=0,
            grid=grid,
            in_specs=[
                pl.BlockSpec((1, th, wblk), lambda g, i, j: (g, i, j)),
                pl.BlockSpec((th, th), lambda g, i, j: (0, 0)),   # fetched once
                pl.BlockSpec((tw, tw), lambda g, i, j: (0, 0)),   # fetched once
            ],
            out_specs=pl.BlockSpec((1, th, wblk), lambda g, i, j: (g, i, j)),
        ),
        compiler_params=pltpu.CompilerParams(
            dimension_semantics=("parallel", "parallel", "parallel")),
        cost_estimate=cost,
    )(xf, lrow, rcol)

    out = out.reshape(B, C, Hp, Wp)
    if inverse:
        # Reference crops the pad only on the inverse path; the forward path
        # returns the padded-size coefficient map (same as the PyTorch code).
        out = out[:, :, :H, :W]
    return out


# ---------------------------------------------------------------------------
# Pure-JAX reference mirroring the PyTorch unfold / bmm / permute pipeline
# ---------------------------------------------------------------------------
def dct_reference(x, dct_mat, block_size=8, inverse=False):
    B, C, H, W = x.shape
    pad_h = (-H) % block_size
    pad_w = (-W) % block_size
    xp = jnp.pad(x, ((0, 0), (0, 0), (0, pad_h), (0, pad_w)))
    Hp, Wp = H + pad_h, W + pad_w
    nh, nw = Hp // block_size, Wp // block_size
    blocks = xp.reshape(B, C, nh, block_size, nw, block_size)
    blocks = jnp.transpose(blocks, (0, 1, 2, 4, 3, 5))        # (B,C,nh,nw,8,8)
    d = jnp.asarray(dct_mat, jnp.float32)
    if not inverse:
        out = jnp.einsum('ij,bcnmjl,kl->bcnmik', d, blocks, d)  # D X D^T
    else:
        out = jnp.einsum('ji,bcnmjl,lk->bcnmik', d, blocks, d)  # D^T X D
    out = jnp.transpose(out, (0, 1, 2, 4, 3, 5)).reshape(B, C, Hp, Wp)
    if inverse:
        out = out[:, :, :H, :W]
    return out


# ---------------------------------------------------------------------------
if __name__ == "__main__":
    key = jax.random.PRNGKey(0)
    k1, k2, k3 = jax.random.split(key, 3)
    dct_mat = build_dct_matrix(8)

    fwd = jax.jit(functools.partial(dct_layer, dct_mat=dct_mat, inverse=False))
    inv = jax.jit(functools.partial(dct_layer, dct_mat=dct_mat, inverse=True))

    # Case 1: small, block-aligned spatial dims.
    B, C, H, W = 2, 4, 16, 16
    x = jax.random.normal(k1, (B, C, H, W), jnp.float32)
    y = fwd(x)
    jax.block_until_ready(y)
    y_ref = dct_reference(x, dct_mat, inverse=False)
    assert y.shape == (B, C, H, W)
    assert bool(jnp.allclose(y, y_ref, atol=1e-4, rtol=1e-4))

    x_rt = inv(y)                                  # IDCT(DCT(x)) round trip
    jax.block_until_ready(x_rt)
    assert x_rt.shape == x.shape
    assert bool(jnp.allclose(x_rt, x, atol=1e-4, rtol=1e-4))

    # Case 2: spatial dims NOT multiples of 8 (exercises the zero-pad path).
    x2 = jax.random.normal(k2, (2, 1, 12, 20), jnp.float32)
    y2 = fwd(x2)
    jax.block_until_ready(y2)
    y2_ref = dct_reference(x2, dct_mat, inverse=False)
    assert y2.shape == y2_ref.shape == (2, 1, 16, 24)
    assert bool(jnp.allclose(y2, y2_ref, atol=1e-4, rtol=1e-4))

    # Case 3: exercises multi-strip W blocks and ragged (cdiv) edge tiles.
    x3 = jax.random.normal(k3, (1, 1, 272, 640), jnp.float32)
    y3 = fwd(x3)
    jax.block_until_ready(y3)
    y3_ref = dct_reference(x3, dct_mat, inverse=False)
    assert bool(jnp.allclose(y3, y3_ref, atol=1e-4, rtol=1e-4))
    x3_rt = inv(y3)
    jax.block_until_ready(x3_rt)
    assert bool(jnp.allclose(x3_rt, x3, atol=1e-4, rtol=1e-4))

    assert bool(jnp.all(jnp.isfinite(y))) and bool(jnp.all(jnp.isfinite(y3)))
    print("KERNEL_OK")
</pallas_src>

<mosaic_0001>
module attributes {stable_mosaic.version = 11 : i64} {
  func.func @kernel(%arg0: i32, %arg1: i32, %arg2: i32, %arg3: memref<1x16x16xf32, #tpu.memory_space<vmem>>, %arg4: memref<16x16xf32, #tpu.memory_space<vmem>>, %arg5: memref<16x16xf32, #tpu.memory_space<vmem>>, %arg6: memref<1x16x16xf32, #tpu.memory_space<vmem>>) attributes {dimension_semantics = [#tpu.dimension_semantics<parallel>, #tpu.dimension_semantics<parallel>, #tpu.dimension_semantics<parallel>], iteration_bounds = array<i64: 8, 1, 1>, scalar_prefetch = 0 : i64, scratch_operands = 0 : i64, tpu.core_type = #tpu.core_type<tc>, window_params = [{transform_indices = @transform_0, window_bounds = array<i64: 1, 16, 16>}, {pipeline_mode = #tpu.pipeline_mode<synchronous>, transform_indices = @transform_1, window_bounds = array<i64: 16, 16>}, {pipeline_mode = #tpu.pipeline_mode<synchronous>, transform_indices = @transform_2, window_bounds = array<i64: 16, 16>}, {transform_indices = @transform_3, window_bounds = array<i64: 1, 16, 16>}]} {
    %c0 = arith.constant 0 : index
    %c0_0 = arith.constant 0 : index
    %0 = vector.load %arg4[%c0, %c0_0] : memref<16x16xf32, #tpu.memory_space<vmem>>, vector<16x16xf32>
    %c0_1 = arith.constant 0 : index
    %c0_2 = arith.constant 0 : index
    %1 = vector.load %arg5[%c0_1, %c0_2] : memref<16x16xf32, #tpu.memory_space<vmem>>, vector<16x16xf32>
    %c0_3 = arith.constant 0 : index
    %c0_4 = arith.constant 0 : index
    %c0_5 = arith.constant 0 : index
    %2 = vector.load %arg3[%c0_3, %c0_4, %c0_5] : memref<1x16x16xf32, #tpu.memory_space<vmem>>, vector<1x16x16xf32>
    %3 = vector.shape_cast %2 : vector<1x16x16xf32> to vector<16x16xf32>
    %cst = arith.constant dense<0.000000e+00> : vector<16x16xf32>
    %4 = tpu.matmul %0, %3, %cst {dimension_numbers = #tpu.dot_dimension_numbers<[1], [0], [0], [1], [0, 0, 1, 1], [], []>} : vector<16x16xf32>, vector<16x16xf32>, vector<16x16xf32> -> vector<16x16xf32>
    %cst_6 = arith.constant dense<0.000000e+00> : vector<16x16xf32>
    %5 = tpu.matmul %4, %1, %cst_6 {dimension_numbers = #tpu.dot_dimension_numbers<[1], [0], [0], [1], [0, 0, 1, 1], [], []>} : vector<16x16xf32>, vector<16x16xf32>, vector<16x16xf32> -> vector<16x16xf32>
    %c0_7 = arith.constant 0 : index
    %c0_8 = arith.constant 0 : index
    %c0_9 = arith.constant 0 : index
    %6 = vector.load %arg6[%c0_7, %c0_8, %c0_9] : memref<1x16x16xf32, #tpu.memory_space<vmem>>, vector<1x16x16xf32>
    %7 = vector.shape_cast %6 : vector<1x16x16xf32> to vector<16x16xf32>
    %8 = vector.shape_cast %5 : vector<16x16xf32> to vector<1x16x16xf32>
    tpu.vector_store %arg6[%c0_7, %c0_8, %c0_9], %8 {strides = array<i32>} : memref<1x16x16xf32, #tpu.memory_space<vmem>>, vector<1x16x16xf32>,
    return
  }
  func.func @transform_0(%arg0: i32, %arg1: i32, %arg2: i32) -> (i32, i32, i32) {
    %c0_i32 = arith.constant 0 : i32
    return %arg0, %arg1, %arg2 : i32, i32, i32
  }
  func.func @transform_1(%arg0: i32, %arg1: i32, %arg2: i32) -> (i32, i32) {
    %c0_i32 = arith.constant 0 : i32
    %c0_i32_0 = arith.constant 0 : i32
    %c0_i32_1 = arith.constant 0 : i32
    return %c0_i32, %c0_i32_0 : i32, i32
  }
  func.func @transform_2(%arg0: i32, %arg1: i32, %arg2: i32) -> (i32, i32) {
    %c0_i32 = arith.constant 0 : i32
    %c0_i32_0 = arith.constant 0 : i32
    %c0_i32_1 = arith.constant 0 : i32
    return %c0_i32, %c0_i32_0 : i32, i32
  }
  func.func @transform_3(%arg0: i32, %arg1: i32, %arg2: i32) -> (i32, i32, i32) {
    %c0_i32 = arith.constant 0 : i32
    return %arg0, %arg1, %arg2 : i32, i32, i32
  }
}

</mosaic_0001>

<llo_original>
// kernel: dct_layer.1
$region0: #{dct_layer.1}
  #allocation0 [shape = 'u32[]', space=smem, size = 0x4, offset = 0x4, fixed_abs, tag = 'smem constant byte address 0x4 - core index']
  #allocation1 [shape = 'u32[144,128]{1,0:T(1,128)}', space=vmem, size = 0x12000, scoped, tag = 'internal scratch']
  %s0 = inlined_call_operand.hbm [shape: f32[8,16,16], index: 0, kind: input, shape index: {}]
  %s1 = inlined_call_operand.hbm [shape: f32[16,16], index: 1, kind: input, shape index: {}]
  %s2 = inlined_call_operand.hbm [shape: f32[16,16], index: 2, kind: input, shape index: {}]
  %s3 = inlined_call_operand.hbm [shape: f32[8,16,16], index: 3, kind: output, shape index: {}]
  %s4 = sld [smem:[#allocation0]]
  $region57: #{dct_layer.1} parent=0
    _
  %s6 = ssub.s32 1, %s4
  %s7 = scalar_select 0, %s6, %s4
  $region1: #{dct_layer.1} parent=0
    #allocation2 [shape = 'u8[16384]{0}', space=vmem, size = 0x4000, scoped, tag = 'input window, operand 0']
    #allocation3 [shape = 's32[2]{0}', space=sflag, size = 0x8, scoped, tag = 'scoped memory for dct_layer.1']
    #allocation4 [shape = 's32[2]{0}', space=sflag, size = 0x8, scoped, tag = 'scoped memory for dct_layer.1']
    #allocation5 [shape = 'u8[8192]{0}', space=vmem, size = 0x2000, scoped, tag = 'input window, operand 1, single buffered']
    #allocation6 [shape = 's32[1]{0}', space=sflag, size = 0x4, scoped, tag = 'scoped memory for dct_layer.1']
    #allocation7 [shape = 'u8[8192]{0}', space=vmem, size = 0x2000, scoped, tag = 'input window, operand 2, single buffered']
    #allocation8 [shape = 'u8[16384]{0}', space=vmem, size = 0x4000, scoped, tag = 'output window, operand 0']
    %8 = vsyncpa [#allocation3], 0
    %s9 = scalar_lea.sflag [#allocation3], 1
    %10 = vsyncpa %s9, 0
    %11 = vsyncpa [#allocation6], 0
    %12 = vsyncpa [#allocation4], 0
    %s13 = scalar_lea.sflag [#allocation4], 1
    %14 = vsyncpa %s13, 0
    loop: start=0, step=1, limit=10
    $region2: #{dct_layer.1} parent=1 // loop_pre_header
      _
    $region3: #{dct_layer.1} parent=1 // loop_header
      %s16 = sphi 0, %s20
      %p17 = scmp.ge.s32.totalorder %s16, 10
      %s23 = sphi 0, %s42
      %s24 = sphi 0, %s38
      %s25 = sphi 0, %s34
      %s26 = sphi 0, %s23
      %s27 = sphi 0, %s24
      %s28 = sphi 0, %s25
      %s29 = sphi 0, %s26
      %s30 = sphi 0, %s27
      %s31 = sphi 0, %s28
      %s49 = sphi 0, %s51
      %s52 = sphi 0, %s49
      %s53 = sphi 0, %s52
      %s69 = sphi 0, %s53
      %s73 = sphi 0, %s73
      %s75 = sphi 0, %s73
      %s76 = sphi 0, %s75
      %s90 = sphi 0, %s76
      %s94 = sphi 0, %s94
      %s96 = sphi 0, %s94
      %s97 = sphi 0, %s96
      %s111 = sphi 0, %s97
      %s121 = sphi 0, %s123
      %s124 = sphi 0, %s121
      %s125 = sphi 0, %s124
      %s141 = sphi 0, %s125
    $region4: #{dct_layer.1} parent=1 // loop_header_branch
      %19 = sbr.rel (%p17) target = $region8
    $region5: #{dct_layer.1} parent=1 // loop_body
      %s21 = ssub.s32 %s16, 1
      %s22 = ssub.s32 %s16, 2
      %s32 = sadd.s32 1, %s25
      %p33 = scmp.ge.s32.totalorder %s32, 1
      %s34 = scalar_select %p33, 0, %s32
      %s35 = sadd.s32 1, %s24
      %s36 = scalar_select %p33, %s35, %s24
      %p37 = scmp.ge.s32.totalorder %s36, 1
      %s38 = scalar_select %p37, 0, %s36
      %s39 = sadd.s32 1, %s23
      %s40 = scalar_select %p37, %s39, %s23
      %p41 = scmp.ge.s32.totalorder %s40, 8
      %s42 = scalar_select %p41, 0, %s40
      %s43 = ssub.s32 %s23, %s42
      %s44 = ssub.s32 %s24, %s38
      %s45 = sor.u32 %s43, %s44
      %s46 = ssub.s32 %s25, %s34
      %s47 = sor.u32 %s45, %s46
      %p48 = scmp.eq.s32.totalorder %s47, 0
      %s50 = sadd.s32 %s49, 1
      %s51 = scalar_select %p48, %s49, %s50
      %p54 = pneg %p48
      %p55 = scmp.eq.s32.totalorder %s16, 7
      %p56 = por %p54, %p55
      %p57 = scmp.ne.s32.totalorder %s49, %s52
      %p58 = scmp.eq.s32.totalorder %s16, 0
      %p59 = por %p57, %p58
      %p60 = scmp.ne.s32.totalorder %s49, %s52
      %p61 = scmp.eq.s32.totalorder %s21, 7
      %p62 = por %p60, %p61
      %p63 = scmp.ne.s32.totalorder %s52, %s53
      %p64 = scmp.eq.s32.totalorder %s21, 0
      %p65 = por %p63, %p64
      %p66 = scmp.ne.s32.totalorder %s52, %s53
      %p67 = scmp.eq.s32.totalorder %s22, 7
      %p68 = por %p66, %p67
      %p70 = scmp.ne.s32.totalorder %s53, %s69
      %p71 = scmp.eq.s32.totalorder %s22, 0
      %p72 = por %p70, %p71
      %s74 = sadd.s32 %s73, 1
      %p77 = scmp.eq.s32.totalorder %s16, 7
      %p78 = scmp.ne.s32.totalorder %s73, %s75
      %p79 = scmp.eq.s32.totalorder %s16, 0
      %p80 = por %p78, %p79
      %p81 = scmp.ne.s32.totalorder %s73, %s75
      %p82 = scmp.eq.s32.totalorder %s21, 7
      %p83 = por %p81, %p82
      %p84 = scmp.ne.s32.totalorder %s75, %s76
      %p85 = scmp.eq.s32.totalorder %s21, 0
      %p86 = por %p84, %p85
      %p87 = scmp.ne.s32.totalorder %s75, %s76
      %p88 = scmp.eq.s32.totalorder %s22, 7
      %p89 = por %p87, %p88
      %p91 = scmp.ne.s32.totalorder %s76, %s90
      %p92 = scmp.eq.s32.totalorder %s22, 0
      %p93 = por %p91, %p92
      %s95 = sadd.s32 %s94, 1
      %p98 = scmp.eq.s32.totalorder %s16, 7
      %p99 = scmp.ne.s32.totalorder %s94, %s96
      %p100 = scmp.eq.s32.totalorder %s16, 0
      %p101 = por %p99, %p100
      %p102 = scmp.ne.s32.totalorder %s94, %s96
      %p103 = scmp.eq.s32.totalorder %s21, 7
      %p104 = por %p102, %p103
      %p105 = scmp.ne.s32.totalorder %s96, %s97
      %p106 = scmp.eq.s32.totalorder %s21, 0
      %p107 = por %p105, %p106
      %p108 = scmp.ne.s32.totalorder %s96, %s97
      %p109 = scmp.eq.s32.totalorder %s22, 7
      %p110 = por %p108, %p109
      %p112 = scmp.ne.s32.totalorder %s97, %s111
      %p113 = scmp.eq.s32.totalorder %s22, 0
      %p114 = por %p112, %p113
      %s115 = ssub.s32 %s23, %s42
      %s116 = ssub.s32 %s24, %s38
      %s117 = sor.u32 %s115, %s116
      %s118 = ssub.s32 %s25, %s34
      %s119 = sor.u32 %s117, %s118
      %p120 = scmp.eq.s32.totalorder %s119, 0
      %s122 = sadd.s32 %s121, 1
      %s123 = scalar_select %p120, %s121, %s122
      %p126 = pneg %p120
      %p127 = scmp.eq.s32.totalorder %s16, 7
      %p128 = por %p126, %p127
      %p129 = scmp.ne.s32.totalorder %s121, %s124
      %p130 = scmp.eq.s32.totalorder %s16, 0
      %p131 = por %p129, %p130
      %p132 = scmp.ne.s32.totalorder %s121, %s124
      %p133 = scmp.eq.s32.totalorder %s21, 7
      %p134 = por %p132, %p133
      %p135 = scmp.ne.s32.totalorder %s124, %s125
      %p136 = scmp.eq.s32.totalorder %s21, 0
      %p137 = por %p135, %p136
      %p138 = scmp.ne.s32.totalorder %s124, %s125
      %p139 = scmp.eq.s32.totalorder %s22, 7
      %p140 = por %p138, %p139
      %p142 = scmp.ne.s32.totalorder %s125, %s141
      %p143 = scmp.eq.s32.totalorder %s22, 0
      %p144 = por %p142, %p143
      %p145 = scmp.le.s32.totalorder 1, %s16
      %p146 = scmp.lt.s32.totalorder %s16, 9
      %p147 = pnand %p145, %p146
      %p148 = pneg %p147
      // Predicated region
      $region9: #{dct_layer.1} parent=5 // pred_check
        _
      $region10: #{dct_layer.1} parent=5 // pred_check_branch
        %150 = sbr.rel (%p147) target = $region12
      $region11: #{dct_layer.1} parent=5 // pred_region
        %s151 = ssub.s32 %s16, 1
        // Predicated region
        $region13: #{dct_layer.1} parent=11 // pred_check
          %p152 = pneg %p86
        $region14: #{dct_layer.1} parent=11 // pred_check_branch
          %154 = sbr.rel (%p152) target = $region16
        $region15: #{dct_layer.1} parent=11 // pred_region
          %s156 = ssub.s32 256, 256
          %157 = vsyncadd [#allocation6], %s156
          %s158 = sshll.u32 [#allocation5], 4
          %s159 = int_to_ptr.vmem [resolvable:$true] %s158
          %164 = dma.hbm_to_vmem [thread:$0]  %s1, 256, %s159, [#allocation6], 128, 128, 8
        $region16: #{dct_layer.1} parent=11 // pred_fallthru
          _
        // Predicated region
        $region17: #{dct_layer.1} parent=11 // pred_check
          %p165 = pneg %p107
        $region18: #{dct_layer.1} parent=11 // pred_check_branch
          %167 = sbr.rel (%p165) target = $region20
        $region19: #{dct_layer.1} parent=11 // pred_region
          %s169 = ssub.s32 256, 256
          %170 = vsyncadd [#allocation6], %s169
          %s171 = sshll.u32 [#allocation7], 4
          %s172 = int_to_ptr.vmem [resolvable:$true] %s171
          %177 = dma.hbm_to_vmem [thread:$0]  %s2, 256, %s172, [#allocation6], 128, 128, 8
        $region20: #{dct_layer.1} parent=11 // pred_fallthru
          _
      $region12: #{dct_layer.1} parent=5 // pred_fallthru
        _
      %p178 = scmp.lt.s32.totalorder %s16, 8
      // Predicated region
      $region21: #{dct_layer.1} parent=5 // pred_check
        %p179 = pneg %p178
      $region22: #{dct_layer.1} parent=5 // pred_check_branch
        %181 = sbr.rel (%p179) target = $region24
      $region23: #{dct_layer.1} parent=5 // pred_region
        // Predicated region
        $region25: #{dct_layer.1} parent=23 // pred_check
          %p182 = pneg %p59
        $region26: #{dct_layer.1} parent=23 // pred_check_branch
          %184 = sbr.rel (%p182) target = $region28
        $region27: #{dct_layer.1} parent=23 // pred_region
          %s185 = sand.u32 %s49, 1
          %s186 = scalar_lea.sflag [#allocation3], %s185
          %s187 = sand.u32 %s49, 1
          %s188 = smul.addr %s187, 16
          %s189 = scalar_lea.vmem [#allocation2], %s188
          %s190 = smul.u32 2, %s24
          %s192 = ssub.s32 256, 256
          %193 = vsyncadd %s186, %s192
          %s194 = sadd.s32 %s25, %s190
          %s195 = smul.addr %s23, 2
          %s196 = sadd.s32 %s194, %s195
          %s197 = smul.addr %s196, 128
          %s198 = scalar_lea.hbm %s0, %s197
          %s199 = sshll.u32 %s189, 4
          %s200 = int_to_ptr.vmem [resolvable:$true] %s199
          %205 = dma.hbm_to_vmem [thread:$0]  %s198, 256, %s200, %s186, 128, 128, 8
        $region28: #{dct_layer.1} parent=23 // pred_fallthru
          _
      $region24: #{dct_layer.1} parent=5 // pred_fallthru
        _
      %p206 = scmp.le.s32.totalorder 1, %s16
      %p207 = scmp.lt.s32.totalorder %s16, 9
      %p208 = pnand %p206, %p207
      %p209 = pneg %p208
      // Predicated region
      $region29: #{dct_layer.1} parent=5 // pred_check
        _
      $region30: #{dct_layer.1} parent=5 // pred_check_branch
        %211 = sbr.rel (%p208) target = $region32
      $region31: #{dct_layer.1} parent=5 // pred_region
        %s212 = ssub.s32 %s16, 1
        %s213 = sand.u32 %s52, 1
        %s214 = scalar_lea.sflag [#allocation3], %s213
        %s215 = sand.u32 %s52, 1
        %s216 = smul.addr %s215, 16
        %s217 = scalar_lea.vmem [#allocation2], %s216
        // Predicated region
        $region33: #{dct_layer.1} parent=31 // pred_check
          %p218 = pneg %p65
        $region34: #{dct_layer.1} parent=31 // pred_check_branch
          %220 = sbr.rel (%p218) target = $region36
        $region35: #{dct_layer.1} parent=31 // pred_region
          %221 = dma.done %s214, 256
        $region36: #{dct_layer.1} parent=31 // pred_fallthru
          _
        // Predicated region
        $region37: #{dct_layer.1} parent=31 // pred_check
          %p222 = pneg %p86
        $region38: #{dct_layer.1} parent=31 // pred_check_branch
          %224 = sbr.rel (%p222) target = $region40
        $region39: #{dct_layer.1} parent=31 // pred_region
          %225 = dma.done [#allocation6], 256
        $region40: #{dct_layer.1} parent=31 // pred_fallthru
          _
        // Predicated region
        $region41: #{dct_layer.1} parent=31 // pred_check
          %p226 = pneg %p107
        $region42: #{dct_layer.1} parent=31 // pred_check_branch
          %228 = sbr.rel (%p226) target = $region44
        $region43: #{dct_layer.1} parent=31 // pred_region
          %229 = dma.done [#allocation6], 256
        $region44: #{dct_layer.1} parent=31 // pred_fallthru
          _
        %s230 = sand.u32 %s52, 1
        %s231 = scalar_lea.sflag [#allocation3], %s230
        %s232 = sand.u32 %s52, 1
        %s233 = smul.addr %s232, 16
        %s234 = scalar_lea.vmem [#allocation2], %s233
        %p235 = pneg %p65
        %p236 = pneg %p62
        %p237 = pneg %p86
        %p238 = pneg %p83
        %p239 = pneg %p107
        %p240 = pneg %p104
        %p241 = pneg %p137
        %p242 = pneg %p134
        %s243 = sand.u32 %s124, 1
        %s244 = scalar_lea.sflag [#allocation4], %s243
        %s245 = sand.u32 %s124, 1
        %s246 = smul.addr %s245, 16
        %s247 = scalar_lea.vmem [#allocation8], %s246
        %s248 = smul.u32 2, %s27
        %s249 = smul.u32 2, %s27
        %v250 = vld [vmem:[#allocation5] sm:$0xff]
        %v251 = vld [vmem:[#allocation5 + $0x8] sm:$0xff]
        %v252 = vld [vmem:[#allocation7] sm:$0xff]
        %v253 = vld [vmem:[#allocation7 + $0x8] sm:$0xff]
        %v254 = vld [vmem:[%s217] sm:$0xff]
        %v255 = vld [vmem:[%s217 + $0x8] sm:$0xff]
        %vm256 = vcmask 130048
        %v258 = vsel %vm256, %v250, 0
        %v261 = vsel %vm256, %v251, 0
        %263 = vmatprep.subr.mxu0 0.0
        %264 = vmatpush1.msra.mxu0 0.0
        %265 = vmatprep.subr.mxu0 0.0
        %266 = vmatpush1.msra.mxu0 0.0
        %267 = vmatprep.subr.mxu0 0.0
        %268 = vmatpush1.msra.mxu0 0.0
        %269 = vmatprep.subr.mxu0 0.0
        %270 = vmatpush1.msra.mxu0 0.0
        %271 = vmatprep.subr.mxu0 0.0
        %272 = vmatpush1.msra.mxu0 0.0
        %273 = vmatprep.subr.mxu0 0.0
        %274 = vmatpush1.msra.mxu0 0.0
        %275 = vmatprep.subr.mxu0 0.0
        %276 = vmatpush1.msra.mxu0 0.0
        %277 = vmatprep.subr.mxu0 0.0
        %278 = vmatpush1.msra.mxu0 0.0
        %279 = vmatprep.subr.mxu0 0.0
        %280 = vmatpush1.msra.mxu0 0.0
        %281 = vmatprep.subr.mxu0 0.0
        %282 = vmatpush1.msra.mxu0 0.0
        %283 = vmatprep.subr.mxu0 0.0
        %284 = vmatpush1.msra.mxu0 0.0
        %285 = vmatprep.subr.mxu0 0.0
        %286 = vmatpush1.msra.mxu0 0.0
        %287 = vmatprep.subr.mxu0 0.0
        %288 = vmatpush1.msra.mxu0 0.0
        %289 = vmatprep.subr.mxu0 0.0
        %290 = vmatpush1.msra.mxu0 0.0
        %291 = vmatprep.subr.mxu0 0.0
        %292 = vmatpush1.msra.mxu0 %v255
        %293 = vmatprep.subr.mxu0 0.0
        %294 = vmatpush1.msra.mxu0 %v254
        %295 = vmatprep.subr.mxu0 0.0
        %296 = vmatpush2.msra.mxu0 0.0
        %297 = vmatprep.subr.mxu0 0.0
        %298 = vmatpush2.msra.mxu0 0.0
        %299 = vmatprep.subr.mxu0 0.0
        %300 = vmatpush2.msra.mxu0 0.0
        %301 = vmatprep.subr.mxu0 0.0
        %302 = vmatpush2.msra.mxu0 0.0
        %303 = vmatprep.subr.mxu0 0.0
        %304 = vmatpush2.msra.mxu0 0.0
        %305 = vmatprep.subr.mxu0 0.0
        %306 = vmatpush2.msra.mxu0 0.0
        %307 = vmatprep.subr.mxu0 0.0
        %308 = vmatpush2.msra.mxu0 0.0
        %309 = vmatprep.subr.mxu0 0.0
        %310 = vmatpush2.msra.mxu0 0.0
        %311 = vmatprep.subr.mxu0 0.0
        %312 = vmatpush2.msra.mxu0 0.0
        %313 = vmatprep.subr.mxu0 0.0
        %314 = vmatpush2.msra.mxu0 0.0
        %315 = vmatprep.subr.mxu0 0.0
        %316 = vmatpush2.msra.mxu0 0.0
        %317 = vmatprep.subr.mxu0 0.0
        %318 = vmatpush2.msra.mxu0 0.0
        %319 = vmatprep.subr.mxu0 0.0
        %320 = vmatpush2.msra.mxu0 0.0
        %321 = vmatprep.subr.mxu0 0.0
        %322 = vmatpush2.msra.mxu0 0.0
        %323 = vmatprep.subr.mxu0 0.0
        %324 = vmatpush2.msra.mxu0 0.0
        %325 = vmatprep.subr.mxu0 0.0
        %326 = vmatpush2.msra.mxu0 0.0
        %327 = vmatprep.mubr.f32.mxu0 0.0
        %328 = vmatmul.mubr.f32.gmra.mxu0 %v258
        %v329 = vpop.f32.mrf.mxu0
        %v330 = vadd.f32 0.0, %v329
        %v331 = vpop.f32.mrf.mxu0
        %332 = vmatprep.mubr.f32.mxu0 0.0
        %333 = vmatmul.mubr.f32.gmra.mxu0 %v261
        %v334 = vpop.f32.mrf.mxu0
        %v335 = vadd.f32 0.0, %v334
        %v336 = vpop.f32.mrf.mxu0
        %337 = vdwg.mxu0
        %v339 = vsel %vm256, %v330, 0
        %v342 = vsel %vm256, %v335, 0
        %344 = vmatprep.subr.mxu0 0.0
        %345 = vmatpush1.msra.mxu0 0.0
        %346 = vmatprep.subr.mxu0 0.0
        %347 = vmatpush1.msra.mxu0 0.0
        %348 = vmatprep.subr.mxu0 0.0
        %349 = vmatpush1.msra.mxu0 0.0
        %350 = vmatprep.subr.mxu0 0.0
        %351 = vmatpush1.msra.mxu0 0.0
        %352 = vmatprep.subr.mxu0 0.0
        %353 = vmatpush1.msra.mxu0 0.0
        %354 = vmatprep.subr.mxu0 0.0
        %355 = vmatpush1.msra.mxu0 0.0
        %356 = vmatprep.subr.mxu0 0.0
        %357 = vmatpush1.msra.mxu0 0.0
        %358 = vmatprep.subr.mxu0 0.0
        %359 = vmatpush1.msra.mxu0 0.0
        %360 = vmatprep.subr.mxu0 0.0
        %361 = vmatpush1.msra.mxu0 0.0
        %362 = vmatprep.subr.mxu0 0.0
        %363 = vmatpush1.msra.mxu0 0.0
        %364 = vmatprep.subr.mxu0 0.0
        %365 = vmatpush1.msra.mxu0 0.0
        %366 = vmatprep.subr.mxu0 0.0
        %367 = vmatpush1.msra.mxu0 0.0
        %368 = vmatprep.subr.mxu0 0.0
        %369 = vmatpush1.msra.mxu0 0.0
        %370 = vmatprep.subr.mxu0 0.0
        %371 = vmatpush1.msra.mxu0 0.0
        %372 = vmatprep.subr.mxu0 0.0
        %373 = vmatpush1.msra.mxu0 %v253
        %374 = vmatprep.subr.mxu0 0.0
        %375 = vmatpush1.msra.mxu0 %v252
        %376 = vmatprep.subr.mxu0 0.0
        %377 = vmatpush2.msra.mxu0 0.0
        %378 = vmatprep.subr.mxu0 0.0
        %379 = vmatpush2.msra.mxu0 0.0
        %380 = vmatprep.subr.mxu0 0.0
        %381 = vmatpush2.msra.mxu0 0.0
        %382 = vmatprep.subr.mxu0 0.0
        %383 = vmatpush2.msra.mxu0 0.0
        %384 = vmatprep.subr.mxu0 0.0
        %385 = vmatpush2.msra.mxu0 0.0
        %386 = vmatprep.subr.mxu0 0.0
        %387 = vmatpush2.msra.mxu0 0.0
        %388 = vmatprep.subr.mxu0 0.0
        %389 = vmatpush2.msra.mxu0 0.0
        %390 = vmatprep.subr.mxu0 0.0
        %391 = vmatpush2.msra.mxu0 0.0
        %392 = vmatprep.subr.mxu0 0.0
        %393 = vmatpush2.msra.mxu0 0.0
        %394 = vmatprep.subr.mxu0 0.0
        %395 = vmatpush2.msra.mxu0 0.0
        %396 = vmatprep.subr.mxu0 0.0
        %397 = vmatpush2.msra.mxu0 0.0
        %398 = vmatprep.subr.mxu0 0.0
        %399 = vmatpush2.msra.mxu0 0.0
        %400 = vmatprep.subr.mxu0 0.0
        %401 = vmatpush2.msra.mxu0 0.0
        %402 = vmatprep.subr.mxu0 0.0
        %403 = vmatpush2.msra.mxu0 0.0
        %404 = vmatprep.subr.mxu0 0.0
        %405 = vmatpush2.msra.mxu0 0.0
        %406 = vmatprep.subr.mxu0 0.0
        %407 = vmatpush2.msra.mxu0 0.0
        %408 = vmatprep.mubr.f32.mxu0 0.0
        %409 = vmatmul.mubr.f32.gmra.mxu0 %v339
        %v410 = vpop.f32.mrf.mxu0
        %v411 = vadd.f32 0.0, %v410
        %v412 = vpop.f32.mrf.mxu0
        %413 = vmatprep.mubr.f32.mxu0 0.0
        %414 = vmatmul.mubr.f32.gmra.mxu0 %v342
        %v415 = vpop.f32.mrf.mxu0
        %v416 = vadd.f32 0.0, %v415
        %v417 = vpop.f32.mrf.mxu0
        %418 = vdwg.mxu0
        %419 = vst.msk [vmem:[%s247] sm:$0xff] %vm256, %v411
        %420 = vst.msk [vmem:[%s247 + $0x8] sm:$0xff] %vm256, %v416
        %s421 = sand.u32 %s124, 1
        %s422 = scalar_lea.sflag [#allocation4], %s421
        %s423 = sand.u32 %s124, 1
        %s424 = smul.addr %s423, 16
        %s425 = scalar_lea.vmem [#allocation8], %s424
        // Predicated region
        $region45: #{dct_layer.1} parent=31 // pred_check
          %p426 = pneg %p134
        $region46: #{dct_layer.1} parent=31 // pred_check_branch
          %428 = sbr.rel (%p426) target = $region48
        $region47: #{dct_layer.1} parent=31 // pred_region
          %s429 = smul.u32 2, %s27
          %s431 = ssub.s32 256, 256
          %432 = vsyncadd %s422, %s431
          %s433 = sadd.s32 %s28, %s429
          %s434 = smul.addr %s26, 2
          %s435 = sadd.s32 %s433, %s434
          %s436 = smul.addr %s435, 128
          %s437 = scalar_lea.hbm %s3, %s436
          %s438 = sshll.u32 %s425, 4
          %s439 = int_to_ptr.vmem [resolvable:$true] %s438
          %444 = dma.vmem_to_hbm [thread:$0]  %s439, 256, %s437, %s422, 128, 128, 8
        $region48: #{dct_layer.1} parent=31 // pred_fallthru
          _
      $region32: #{dct_layer.1} parent=5 // pred_fallthru
        _
      %p445 = scmp.le.s32.totalorder 2, %s16
      // Predicated region
      $region49: #{dct_layer.1} parent=5 // pred_check
        %p446 = pneg %p445
      $region50: #{dct_layer.1} parent=5 // pred_check_branch
        %448 = sbr.rel (%p446) target = $region52
      $region51: #{dct_layer.1} parent=5 // pred_region
        %s449 = ssub.s32 %s16, 2
        // Predicated region
        $region53: #{dct_layer.1} parent=51 // pred_check
          %p450 = pneg %p140
        $region54: #{dct_layer.1} parent=51 // pred_check_branch
          %452 = sbr.rel (%p450) target = $region56
        $region55: #{dct_layer.1} parent=51 // pred_region
          %s453 = sand.u32 %s125, 1
          %s454 = scalar_lea.sflag [#allocation4], %s453
          %s455 = sand.u32 %s125, 1
          %s456 = smul.addr %s455, 16
          %s457 = scalar_lea.vmem [#allocation8], %s456
          %458 = dma.done %s454, 256
        $region56: #{dct_layer.1} parent=51 // pred_fallthru
          _
      $region52: #{dct_layer.1} parent=5 // pred_fallthru
        _
    $region6: #{dct_layer.1} parent=1 // loop_footer
      %s20 = sadd.s32 1, %s16
    $region7: #{dct_layer.1} parent=1 // loop_footer_branch
      %15 = sbr.rel target = $region3
    $region8: #{dct_layer.1} parent=1 // loop_exit
      _
    %459 = vsyncpa [#allocation3], 1
    %s460 = scalar_lea.sflag [#allocation3], 1
    %461 = vsyncpa %s460, 1
    %462 = vsyncpa [#allocation6], 1
    %463 = vsyncpa [#allocation4], 1
    %s464 = scalar_lea.sflag [#allocation4], 1
    %465 = vsyncpa %s464, 1

</llo_original>
